<compile_context>
chip_gen: v5e
topology: v5e:2x2
jax: 0.10.0
libtpu: 0.0.40
codegen_flags: <defaults>
</compile_context>

<pallas_src>
import jax
import jax.numpy as jnp
from jax.experimental import pallas as pl
from jax.experimental.pallas import tpu as pltpu

_LANE = 128
_SUBLANE = 8


def _round_up(n, m):
    return (n + m - 1) // m * m


def _mish(v):
    # mish(x) = x*tanh(softplus(x)) = x*(e^2+2e)/(e^2+2e+2), e = exp(x).
    # Clamp the exp argument so it never overflows (for x > 20, mish(x) == x to
    # f32 precision).  Exact division (not approx reciprocal) per review.
    e = jnp.exp(jnp.minimum(v, 20.0))
    n = e * (e + 2.0)
    return v * (n / (n + 2.0))


def _make_kernel(*, t_pad, t_valid, rblk, hp, op):
    def kernel(x_ref, t_ref, l_ref, w1_ref, b1_ref, w2_ref, b2_ref, wf_ref, bf_ref, o_ref):
        x = x_ref[...]                       # (rblk, hp) f32
        tcol = t_ref[...]                    # (rblk, 1)  int32: time index within sequence
        not_first = tcol > 0                 # t == 0        -> left zero-pad of the conv
        not_last = tcol < (t_pad - 1)        # t == t_pad-1  -> right zero-pad of the conv

        def conv3(h, w_ref, b_ref):
            # 'same' conv (k=3, pad=1) as a single packed matmul: weight columns
            # [k*hp:(k+1)*hp] hold tap k (input offset k-1); taps are recombined
            # with sublane rolls + (rblk,1) boundary masks (the masks also zero the
            # cross-sequence halo created by rolling over the flattened batch).
            y3 = jnp.dot(h.astype(jnp.bfloat16), w_ref[...],
                         preferred_element_type=jnp.float32)        # (rblk, 3*hp)
            c_prev = pltpu.roll(y3[:, 0:hp], shift=1, axis=0)        # row t-1 contribution
            c_prev = jnp.where(not_first, c_prev, 0.0)
            # shift by -1 expressed as the (non-negative) equivalent rblk-1 rotation
            c_next = pltpu.roll(y3[:, 2 * hp:3 * hp], shift=rblk - 1, axis=0)  # row t+1
            c_next = jnp.where(not_last, c_next, 0.0)
            return c_prev + y3[:, hp:2 * hp] + c_next + b_ref[...]

        # TODO(synk): nn.Dropout is identity in eval mode; train-mode dropout not implemented.
        h1 = _mish(conv3(x, w1_ref, b1_ref))
        if t_pad != t_valid:
            # Rows t >= T are time padding: zero them so they act as the conv's zero
            # padding for the second conv (matches PyTorch boundary behaviour).
            h1 = jnp.where(tcol < t_valid, h1, 0.0)
        h2 = _mish(conv3(h1, w2_ref, b2_ref))

        out = (jnp.dot(h2.astype(jnp.bfloat16), wf_ref[...],
                       preferred_element_type=jnp.float32)
               + bf_ref[...] + x)                                   # residual (O == H)

        # masked_fill: keep rows with t < length[b]; single lane-dense full-block store.
        keep = tcol < l_ref[...]
        o_ref[...] = jnp.where(keep, out, 0.0).astype(o_ref.dtype)

    return kernel


def prenet_forward(x, mask, params):
    """x: (B, T, H) f32; mask: (B, T) bool (True = masked/padded frame) or None.

    params: w1, w2: (3, H, H) conv taps (tap k maps input offset k-1, Cin->Cout);
            b1, b2: (1, H); wf: (H, O); bf: (1, O).  Returns (B, T, O).
    """
    B, T, H = x.shape
    O = params["wf"].shape[1]
    assert O == H, "Prenet residual add requires out_dim == hidden_dim"
    assert params["w1"].shape == (3, H, H) and params["w2"].shape == (3, H, H)

    hp = _round_up(H, _LANE)
    op = _round_up(O, _LANE)
    t_pad = _round_up(T, _SUBLANE)

    # ---- block sizing (perf review): large row blocks, batch padded to a multiple ----
    # Rough live bytes per row: x/out (double-buffered) + y3 (3*hp) + h1/h2, all f32.
    row_bytes = 40 * max(hp, op)
    target_rows = max(256, min(2048, (32 << 20) // row_bytes))
    bblk = max(1, min(B, target_rows // t_pad))
    if B >= 2:
        # Keep >= 2 grid steps on the parallel axis so v7x's 2 TensorCores both work.
        bblk = min(bblk, (B + 1) // 2)
    B_pad = _round_up(B, bblk)
    rblk = bblk * t_pad
    rows = B_pad * t_pad
    # TODO(synk): very long sequences (t_pad*hp*4 approaching VMEM) would additionally
    # need a halo-aware time-tile grid axis (mainly relevant on v7x's 64 MiB VMEM).

    # ---- wrapper-side packing / padding (lane-dense, MXU-friendly) ----
    def pack_conv_w(w):                                  # (3, H, H) -> (hp, 3*hp) bf16
        wp = jnp.zeros((hp, 3 * hp), jnp.float32)
        for k in range(3):
            wp = wp.at[:H, k * hp:k * hp + H].set(w[k].astype(jnp.float32))
        return wp.astype(jnp.bfloat16)

    def pad_bias(b, n):                                  # (1, b_dim) -> (1, n) f32
        return jnp.zeros((1, n), jnp.float32).at[:, :b.shape[1]].set(b.astype(jnp.float32))

    # TODO(synk): padded-FLOP audit — for H << 128 most packed-matmul columns multiply
    # zeros; the kernel is sized for production H >= 128 (e.g. 256).
    w1p = pack_conv_w(params["w1"])
    w2p = pack_conv_w(params["w2"])
    b1p = pad_bias(params["b1"], hp)
    b2p = pad_bias(params["b2"], hp)
    wfp = (jnp.zeros((hp, op), jnp.float32)
           .at[:H, :O].set(params["wf"].astype(jnp.float32)).astype(jnp.bfloat16))
    bfp = pad_bias(params["bf"], op)

    # TODO(synk): on v5e (mem-bound for small H) staging x/out in bf16 would halve HBM
    # traffic at the cost of a bf16 residual; kept f32 here for exactness.
    xp = jnp.zeros((B_pad, t_pad, hp), jnp.float32).at[:B, :T, :H].set(x.astype(jnp.float32))
    x_rows = xp.reshape(rows, hp)                        # batch flattened into the row dim

    # TODO(synk): mask is assumed to be a trailing padding mask (the StyleSpeech usage);
    # it is converted to per-sequence lengths for the per-row keep-mask.
    if mask is None:
        lengths = jnp.full((B,), T, dtype=jnp.int32)
    else:
        lengths = jnp.sum(jnp.logical_not(mask), axis=-1).astype(jnp.int32)
    lengths_pad = jnp.zeros((B_pad,), jnp.int32).at[:B].set(lengths)   # padded seqs -> len 0

    # Per-row (rows, 1) columns: time index within sequence, and sequence length.
    tcol = jnp.tile(jnp.arange(t_pad, dtype=jnp.int32), B_pad).reshape(rows, 1)
    lcol = jnp.repeat(lengths_pad, t_pad).reshape(rows, 1)

    kernel = _make_kernel(t_pad=t_pad, t_valid=T, rblk=rblk, hp=hp, op=op)

    # NOTE: weight/bias blocks have constant index maps; pipeline_mode=pl.Buffered(1)
    # could reclaim their double-buffer VMEM on v7x, but footprint here is already small.
    out_rows = pl.pallas_call(
        kernel,
        out_shape=jax.ShapeDtypeStruct((rows, op), x.dtype),
        grid=(B_pad // bblk,),
        in_specs=[
            pl.BlockSpec((rblk, hp), lambda i: (i, 0)),          # x rows
            pl.BlockSpec((rblk, 1), lambda i: (i, 0)),           # time-index column
            pl.BlockSpec((rblk, 1), lambda i: (i, 0)),           # length column
            pl.BlockSpec((hp, 3 * hp), lambda i: (0, 0)),        # conv1 packed W
            pl.BlockSpec((1, hp), lambda i: (0, 0)),             # conv1 bias
            pl.BlockSpec((hp, 3 * hp), lambda i: (0, 0)),        # conv2 packed W
            pl.BlockSpec((1, hp), lambda i: (0, 0)),             # conv2 bias
            pl.BlockSpec((hp, op), lambda i: (0, 0)),            # fc W
            pl.BlockSpec((1, op), lambda i: (0, 0)),             # fc bias
        ],
        out_specs=pl.BlockSpec((rblk, op), lambda i: (i, 0)),
        compiler_params=pltpu.CompilerParams(
            dimension_semantics=("parallel",),
            vmem_limit_bytes=48 * 1024 * 1024),                  # fits v7x's 64 MiB VMEM
    )(x_rows, tcol, lcol, w1p, b1p, w2p, b2p, wfp, bfp)

    return out_rows.reshape(B_pad, t_pad, op)[:B, :T, :O]


def _reference(x, mask, params):
    # Pure-JAX reference: identical math; matmul operands in bf16 (matching the
    # kernel's MXU precision) with f32 accumulation; exact mish.
    def bdot(a, b):
        return jnp.dot(a.astype(jnp.bfloat16), b.astype(jnp.bfloat16),
                       preferred_element_type=jnp.float32)

    def conv3(h, w, b):
        zrow = jnp.zeros_like(h[:, :1, :])
        h_prev = jnp.concatenate([zrow, h[:, :-1, :]], axis=1)
        h_next = jnp.concatenate([h[:, 1:, :], zrow], axis=1)
        return bdot(h_prev, w[0]) + bdot(h, w[1]) + bdot(h_next, w[2]) + b

    def mish(v):
        sp = jnp.maximum(v, 0.0) + jnp.log1p(jnp.exp(-jnp.abs(v)))
        return v * jnp.tanh(sp)

    h1 = mish(conv3(x, params["w1"], params["b1"]))
    h2 = mish(conv3(h1, params["w2"], params["b2"]))
    out = bdot(h2, params["wf"]) + params["bf"] + x
    if mask is not None:
        out = jnp.where(mask[..., None], 0.0, out)
    return out


if __name__ == "__main__":
    B, T, H = 2, 16, 32
    O = H  # residual add requires out_dim == hidden_dim

    key = jax.random.PRNGKey(0)
    ks = jax.random.split(key, 8)
    x = jax.random.normal(ks[0], (B, T, H), dtype=jnp.float32)
    # mask: last few frames of the second sequence are padding
    mask = jnp.zeros((B, T), dtype=bool).at[1, T - 4:].set(True)

    scale = 0.1
    params = {
        "w1": scale * jax.random.normal(ks[1], (3, H, H), dtype=jnp.float32),
        "b1": scale * jax.random.normal(ks[2], (1, H), dtype=jnp.float32),
        "w2": scale * jax.random.normal(ks[3], (3, H, H), dtype=jnp.float32),
        "b2": scale * jax.random.normal(ks[4], (1, H), dtype=jnp.float32),
        "wf": scale * jax.random.normal(ks[5], (H, O), dtype=jnp.float32),
        "bf": scale * jax.random.normal(ks[6], (1, O), dtype=jnp.float32),
    }

    out = jax.block_until_ready(prenet_forward(x, mask, params))
    ref = _reference(x, mask, params)

    assert out.shape == (B, T, O)
    # bf16 MXU operands => allow small numerical slack vs the f32-ish reference
    max_diff = float(jnp.max(jnp.abs(out - ref)))
    assert jnp.allclose(out, ref, atol=2e-2, rtol=2e-2), f"mismatch vs reference: max|d|={max_diff}"

    print("KERNEL_OK")
</pallas_src>

<mosaic_0001>
module attributes {stable_mosaic.version = 11 : i64} {
  func.func @kernel(%arg0: i32, %arg1: memref<16x128xf32, #tpu.memory_space<vmem>>, %arg2: memref<16x1xi32, #tpu.memory_space<vmem>>, %arg3: memref<16x1xi32, #tpu.memory_space<vmem>>, %arg4: memref<128x384xbf16, #tpu.memory_space<vmem>>, %arg5: memref<1x128xf32, #tpu.memory_space<vmem>>, %arg6: memref<128x384xbf16, #tpu.memory_space<vmem>>, %arg7: memref<1x128xf32, #tpu.memory_space<vmem>>, %arg8: memref<128x128xbf16, #tpu.memory_space<vmem>>, %arg9: memref<1x128xf32, #tpu.memory_space<vmem>>, %arg10: memref<16x128xf32, #tpu.memory_space<vmem>>) attributes {dimension_semantics = [#tpu.dimension_semantics<parallel>], iteration_bounds = array<i64: 2>, scalar_prefetch = 0 : i64, scratch_operands = 0 : i64, tpu.core_type = #tpu.core_type<tc>, window_params = [{transform_indices = @transform_0, window_bounds = array<i64: 16, 128>}, {transform_indices = @transform_1, window_bounds = array<i64: 16, 1>}, {transform_indices = @transform_2, window_bounds = array<i64: 16, 1>}, {pipeline_mode = #tpu.pipeline_mode<synchronous>, transform_indices = @transform_3, window_bounds = array<i64: 128, 384>}, {pipeline_mode = #tpu.pipeline_mode<synchronous>, transform_indices = @transform_4, window_bounds = array<i64: 1, 128>}, {pipeline_mode = #tpu.pipeline_mode<synchronous>, transform_indices = @transform_5, window_bounds = array<i64: 128, 384>}, {pipeline_mode = #tpu.pipeline_mode<synchronous>, transform_indices = @transform_6, window_bounds = array<i64: 1, 128>}, {pipeline_mode = #tpu.pipeline_mode<synchronous>, transform_indices = @transform_7, window_bounds = array<i64: 128, 128>}, {pipeline_mode = #tpu.pipeline_mode<synchronous>, transform_indices = @transform_8, window_bounds = array<i64: 1, 128>}, {transform_indices = @transform_9, window_bounds = array<i64: 16, 128>}]} {
    %c0 = arith.constant 0 : index
    %c0_0 = arith.constant 0 : index
    %0 = vector.load %arg1[%c0, %c0_0] : memref<16x128xf32, #tpu.memory_space<vmem>>, vector<16x128xf32>
    %c0_1 = arith.constant 0 : index
    %c0_2 = arith.constant 0 : index
    %1 = vector.load %arg2[%c0_1, %c0_2] : memref<16x1xi32, #tpu.memory_space<vmem>>, vector<16x1xi32>
    %c0_i32 = arith.constant 0 : i32
    %2 = vector.broadcast %c0_i32 : i32 to vector<16x1xi32>
    %3 = arith.cmpi sgt, %1, %2 : vector<16x1xi32>
    %c15_i32 = arith.constant 15 : i32
    %4 = vector.broadcast %c15_i32 : i32 to vector<16x1xi32>
    %5 = arith.cmpi slt, %1, %4 : vector<16x1xi32>
    %6 = arith.truncf %0 : vector<16x128xf32> to vector<16x128xbf16>
    %c0_3 = arith.constant 0 : index
    %c0_4 = arith.constant 0 : index
    %7 = vector.load %arg4[%c0_3, %c0_4] : memref<128x384xbf16, #tpu.memory_space<vmem>>, vector<128x384xbf16>
    %cst = arith.constant dense<0.000000e+00> : vector<16x384xf32>
    %8 = tpu.matmul %6, %7, %cst {dimension_numbers = #tpu.dot_dimension_numbers<[1], [0], [0], [1], [0, 0, 1, 1], [], []>} : vector<16x128xbf16>, vector<128x384xbf16>, vector<16x384xf32> -> vector<16x384xf32>
    %9 = vector.extract_strided_slice %8 {offsets = [0, 0], sizes = [16, 128], strides = [1, 1]} : vector<16x384xf32> to vector<16x128xf32>
    %c1_i32 = arith.constant 1 : i32
    %10 = tpu.dynamic_rotate %9 by %c1_i32 dim 0 : vector<16x128xf32>, i32 -> vector<16x128xf32>
    %cst_5 = arith.constant 0.000000e+00 : f32
    %11 = vector.shape_cast %3 : vector<16x1xi1> to vector<16x1xi1>
    %12 = vector.broadcast %11 : vector<16x1xi1> to vector<16x128xi1>
    %13 = vector.broadcast %cst_5 : f32 to vector<16x128xf32>
    %14 = arith.select %12, %10, %13 : vector<16x128xi1>, vector<16x128xf32>
    %15 = vector.extract_strided_slice %8 {offsets = [0, 256], sizes = [16, 128], strides = [1, 1]} : vector<16x384xf32> to vector<16x128xf32>
    %c15_i32_6 = arith.constant 15 : i32
    %16 = tpu.dynamic_rotate %15 by %c15_i32_6 dim 0 : vector<16x128xf32>, i32 -> vector<16x128xf32>
    %cst_7 = arith.constant 0.000000e+00 : f32
    %17 = vector.shape_cast %5 : vector<16x1xi1> to vector<16x1xi1>
    %18 = vector.broadcast %17 : vector<16x1xi1> to vector<16x128xi1>
    %19 = vector.broadcast %cst_7 : f32 to vector<16x128xf32>
    %20 = arith.select %18, %16, %19 : vector<16x128xi1>, vector<16x128xf32>
    %21 = vector.extract_strided_slice %8 {offsets = [0, 128], sizes = [16, 128], strides = [1, 1]} : vector<16x384xf32> to vector<16x128xf32>
    %22 = arith.addf %14, %21 : vector<16x128xf32>
    %23 = arith.addf %22, %20 : vector<16x128xf32>
    %c0_8 = arith.constant 0 : index
    %c0_9 = arith.constant 0 : index
    %24 = vector.load %arg5[%c0_8, %c0_9] : memref<1x128xf32, #tpu.memory_space<vmem>>, vector<1x128xf32>
    %25 = vector.broadcast %24 : vector<1x128xf32> to vector<16x128xf32>
    %26 = arith.addf %23, %25 : vector<16x128xf32>
    %cst_10 = arith.constant 2.000000e+01 : f32
    %27 = vector.broadcast %cst_10 : f32 to vector<16x128xf32>
    %28 = arith.minimumf %26, %27 : vector<16x128xf32>
    %29 = math.exp %28 : vector<16x128xf32>
    %cst_11 = arith.constant 2.000000e+00 : f32
    %30 = vector.broadcast %cst_11 : f32 to vector<16x128xf32>
    %31 = arith.addf %29, %30 : vector<16x128xf32>
    %32 = arith.mulf %29, %31 : vector<16x128xf32>
    %cst_12 = arith.constant 2.000000e+00 : f32
    %33 = vector.broadcast %cst_12 : f32 to vector<16x128xf32>
    %34 = arith.addf %32, %33 : vector<16x128xf32>
    %35 = arith.divf %32, %34 : vector<16x128xf32>
    %36 = arith.mulf %26, %35 : vector<16x128xf32>
    %37 = arith.truncf %36 : vector<16x128xf32> to vector<16x128xbf16>
    %c0_13 = arith.constant 0 : index
    %c0_14 = arith.constant 0 : index
    %38 = vector.load %arg6[%c0_13, %c0_14] : memref<128x384xbf16, #tpu.memory_space<vmem>>, vector<128x384xbf16>
    %cst_15 = arith.constant dense<0.000000e+00> : vector<16x384xf32>
    %39 = tpu.matmul %37, %38, %cst_15 {dimension_numbers = #tpu.dot_dimension_numbers<[1], [0], [0], [1], [0, 0, 1, 1], [], []>} : vector<16x128xbf16>, vector<128x384xbf16>, vector<16x384xf32> -> vector<16x384xf32>
    %40 = vector.extract_strided_slice %39 {offsets = [0, 0], sizes = [16, 128], strides = [1, 1]} : vector<16x384xf32> to vector<16x128xf32>
    %c1_i32_16 = arith.constant 1 : i32
    %41 = tpu.dynamic_rotate %40 by %c1_i32_16 dim 0 : vector<16x128xf32>, i32 -> vector<16x128xf32>
    %cst_17 = arith.constant 0.000000e+00 : f32
    %42 = vector.shape_cast %3 : vector<16x1xi1> to vector<16x1xi1>
    %43 = vector.broadcast %42 : vector<16x1xi1> to vector<16x128xi1>
    %44 = vector.broadcast %cst_17 : f32 to vector<16x128xf32>
    %45 = arith.select %43, %41, %44 : vector<16x128xi1>, vector<16x128xf32>
    %46 = vector.extract_strided_slice %39 {offsets = [0, 256], sizes = [16, 128], strides = [1, 1]} : vector<16x384xf32> to vector<16x128xf32>
    %c15_i32_18 = arith.constant 15 : i32
    %47 = tpu.dynamic_rotate %46 by %c15_i32_18 dim 0 : vector<16x128xf32>, i32 -> vector<16x128xf32>
    %cst_19 = arith.constant 0.000000e+00 : f32
    %48 = vector.shape_cast %5 : vector<16x1xi1> to vector<16x1xi1>
    %49 = vector.broadcast %48 : vector<16x1xi1> to vector<16x128xi1>
    %50 = vector.broadcast %cst_19 : f32 to vector<16x128xf32>
    %51 = arith.select %49, %47, %50 : vector<16x128xi1>, vector<16x128xf32>
    %52 = vector.extract_strided_slice %39 {offsets = [0, 128], sizes = [16, 128], strides = [1, 1]} : vector<16x384xf32> to vector<16x128xf32>
    %53 = arith.addf %45, %52 : vector<16x128xf32>
    %54 = arith.addf %53, %51 : vector<16x128xf32>
    %c0_20 = arith.constant 0 : index
    %c0_21 = arith.constant 0 : index
    %55 = vector.load %arg7[%c0_20, %c0_21] : memref<1x128xf32, #tpu.memory_space<vmem>>, vector<1x128xf32>
    %56 = vector.broadcast %55 : vector<1x128xf32> to vector<16x128xf32>
    %57 = arith.addf %54, %56 : vector<16x128xf32>
    %cst_22 = arith.constant 2.000000e+01 : f32
    %58 = vector.broadcast %cst_22 : f32 to vector<16x128xf32>
    %59 = arith.minimumf %57, %58 : vector<16x128xf32>
    %60 = math.exp %59 : vector<16x128xf32>
    %cst_23 = arith.constant 2.000000e+00 : f32
    %61 = vector.broadcast %cst_23 : f32 to vector<16x128xf32>
    %62 = arith.addf %60, %61 : vector<16x128xf32>
    %63 = arith.mulf %60, %62 : vector<16x128xf32>
    %cst_24 = arith.constant 2.000000e+00 : f32
    %64 = vector.broadcast %cst_24 : f32 to vector<16x128xf32>
    %65 = arith.addf %63, %64 : vector<16x128xf32>
    %66 = arith.divf %63, %65 : vector<16x128xf32>
    %67 = arith.mulf %57, %66 : vector<16x128xf32>
    %68 = arith.truncf %67 : vector<16x128xf32> to vector<16x128xbf16>
    %c0_25 = arith.constant 0 : index
    %c0_26 = arith.constant 0 : index
    %69 = vector.load %arg8[%c0_25, %c0_26] : memref<128x128xbf16, #tpu.memory_space<vmem>>, vector<128x128xbf16>
    %cst_27 = arith.constant dense<0.000000e+00> : vector<16x128xf32>
    %70 = tpu.matmul %68, %69, %cst_27 {dimension_numbers = #tpu.dot_dimension_numbers<[1], [0], [0], [1], [0, 0, 1, 1], [], []>} : vector<16x128xbf16>, vector<128x128xbf16>, vector<16x128xf32> -> vector<16x128xf32>
    %c0_28 = arith.constant 0 : index
    %c0_29 = arith.constant 0 : index
    %71 = vector.load %arg9[%c0_28, %c0_29] : memref<1x128xf32, #tpu.memory_space<vmem>>, vector<1x128xf32>
    %72 = vector.broadcast %71 : vector<1x128xf32> to vector<16x128xf32>
    %73 = arith.addf %70, %72 : vector<16x128xf32>
    %74 = arith.addf %73, %0 : vector<16x128xf32>
    %c0_30 = arith.constant 0 : index
    %c0_31 = arith.constant 0 : index
    %75 = vector.load %arg3[%c0_30, %c0_31] : memref<16x1xi32, #tpu.memory_space<vmem>>, vector<16x1xi32>
    %76 = arith.cmpi slt, %1, %75 : vector<16x1xi32>
    %cst_32 = arith.constant 0.000000e+00 : f32
    %77 = vector.shape_cast %76 : vector<16x1xi1> to vector<16x1xi1>
    %78 = vector.broadcast %77 : vector<16x1xi1> to vector<16x128xi1>
    %79 = vector.broadcast %cst_32 : f32 to vector<16x128xf32>
    %80 = arith.select %78, %74, %79 : vector<16x128xi1>, vector<16x128xf32>
    %c0_33 = arith.constant 0 : index
    %c0_34 = arith.constant 0 : index
    %81 = vector.load %arg10[%c0_33, %c0_34] : memref<16x128xf32, #tpu.memory_space<vmem>>, vector<16x128xf32>
    tpu.vector_store %arg10[%c0_33, %c0_34], %80 {strides = array<i32>} : memref<16x128xf32, #tpu.memory_space<vmem>>, vector<16x128xf32>,
    return
  }
  func.func @transform_0(%arg0: i32) -> (i32, i32) {
    %c0_i32 = arith.constant 0 : i32
    %c0_i32_0 = arith.constant 0 : i32
    return %arg0, %c0_i32 : i32, i32
  }
  func.func @transform_1(%arg0: i32) -> (i32, i32) {
    %c0_i32 = arith.constant 0 : i32
    %c0_i32_0 = arith.constant 0 : i32
    return %arg0, %c0_i32 : i32, i32
  }
  func.func @transform_2(%arg0: i32) -> (i32, i32) {
    %c0_i32 = arith.constant 0 : i32
    %c0_i32_0 = arith.constant 0 : i32
    return %arg0, %c0_i32 : i32, i32
  }
  func.func @transform_3(%arg0: i32) -> (i32, i32) {
    %c0_i32 = arith.constant 0 : i32
    %c0_i32_0 = arith.constant 0 : i32
    %c0_i32_1 = arith.constant 0 : i32
    return %c0_i32, %c0_i32_0 : i32, i32
  }
  func.func @transform_4(%arg0: i32) -> (i32, i32) {
    %c0_i32 = arith.constant 0 : i32
    %c0_i32_0 = arith.constant 0 : i32
    %c0_i32_1 = arith.constant 0 : i32
    return %c0_i32, %c0_i32_0 : i32, i32
  }
  func.func @transform_5(%arg0: i32) -> (i32, i32) {
    %c0_i32 = arith.constant 0 : i32
    %c0_i32_0 = arith.constant 0 : i32
    %c0_i32_1 = arith.constant 0 : i32
    return %c0_i32, %c0_i32_0 : i32, i32
  }
  func.func @transform_6(%arg0: i32) -> (i32, i32) {
    %c0_i32 = arith.constant 0 : i32
    %c0_i32_0 = arith.constant 0 : i32
    %c0_i32_1 = arith.constant 0 : i32
    return %c0_i32, %c0_i32_0 : i32, i32
  }
  func.func @transform_7(%arg0: i32) -> (i32, i32) {
    %c0_i32 = arith.constant 0 : i32
    %c0_i32_0 = arith.constant 0 : i32
    %c0_i32_1 = arith.constant 0 : i32
    return %c0_i32, %c0_i32_0 : i32, i32
  }
  func.func @transform_8(%arg0: i32) -> (i32, i32) {
    %c0_i32 = arith.constant 0 : i32
    %c0_i32_0 = arith.constant 0 : i32
    %c0_i32_1 = arith.constant 0 : i32
    return %c0_i32, %c0_i32_0 : i32, i32
  }
  func.func @transform_9(%arg0: i32) -> (i32, i32) {
    %c0_i32 = arith.constant 0 : i32
    %c0_i32_0 = arith.constant 0 : i32
    return %arg0, %c0_i32 : i32, i32
  }
}

</mosaic_0001>

<llo_original>
// kernel: tpu_custom_call.1
$region0: #{tpu_custom_call.1}
  #allocation0 [shape = 'u32[]', space=smem, size = 0x4, offset = 0x4, fixed_abs, tag = 'smem constant byte address 0x4 - core index']
  #allocation1 [shape = 'u32[72,128]{1,0:T(1,128)}', space=vmem, size = 0x9000, scoped, tag = 'internal scratch']
  %s0 = inlined_call_operand.hbm [shape: f32[32,128], index: 0, kind: input, shape index: {}]
  %s1 = inlined_call_operand.vmem [shape: s32[32,1], index: 1, kind: input, shape index: {}]
  %s2 = inlined_call_operand.vmem [shape: s32[32,1], index: 2, kind: input, shape index: {}]
  %s3 = inlined_call_operand.hbm [shape: bf16[128,384], index: 3, kind: input, shape index: {}]
  %s4 = inlined_call_operand.vmem [shape: f32[1,128], index: 4, kind: input, shape index: {}]
  %s5 = inlined_call_operand.hbm [shape: bf16[128,384], index: 5, kind: input, shape index: {}]
  %s6 = inlined_call_operand.vmem [shape: f32[1,128], index: 6, kind: input, shape index: {}]
  %s7 = inlined_call_operand.vmem [shape: bf16[128,128], index: 7, kind: input, shape index: {}]
  %s8 = inlined_call_operand.vmem [shape: f32[1,128], index: 8, kind: input, shape index: {}]
  %s9 = inlined_call_operand.hbm [shape: f32[32,128], index: 9, kind: output, shape index: {}]
  %s10 = sld [smem:[#allocation0]]
  $region81: #{tpu_custom_call.1} parent=0
    _
  %s12 = ssub.s32 1, %s10
  %s13 = scalar_select 0, %s12, %s10
  $region1: #{tpu_custom_call.1} parent=0
    #allocation2 [shape = 'u8[16384]{0}', space=vmem, size = 0x4000, scoped, tag = 'input window, operand 0']
    #allocation3 [shape = 's32[2]{0}', space=sflag, size = 0x8, scoped, tag = 'scoped memory for tpu_custom_call.1']
    #allocation4 [shape = 's32[2]{0}', space=sflag, size = 0x8, scoped, tag = 'scoped memory for tpu_custom_call.1']
    #allocation5 [shape = 'u8[98304]{0}', space=vmem, size = 0x18000, scoped, tag = 'input window, operand 3, single buffered']
    #allocation6 [shape = 's32[1]{0}', space=sflag, size = 0x4, scoped, tag = 'scoped memory for tpu_custom_call.1']
    #allocation7 [shape = 'u8[98304]{0}', space=vmem, size = 0x18000, scoped, tag = 'input window, operand 5, single buffered']
    #allocation8 [shape = 'u8[16384]{0}', space=vmem, size = 0x4000, scoped, tag = 'output window, operand 0']
    %14 = vsyncpa [#allocation3], 0
    %s15 = scalar_lea.sflag [#allocation3], 1
    %16 = vsyncpa %s15, 0
    %17 = vsyncpa [#allocation6], 0
    %18 = vsyncpa [#allocation4], 0
    %s19 = scalar_lea.sflag [#allocation4], 1
    %20 = vsyncpa %s19, 0
    loop: start=0, step=1, limit=4
    $region2: #{tpu_custom_call.1} parent=1 // loop_pre_header
      _
    $region3: #{tpu_custom_call.1} parent=1 // loop_header
      %s22 = sphi 0, %s26
      %p23 = scmp.ge.s32.totalorder %s22, 4
      %s32 = sphi 0, %s34
      %s35 = sphi 0, %s32
      %s36 = sphi 0, %s35
      %s52 = sphi 0, %s36
      %s58 = sphi 0, %s60
      %s61 = sphi 0, %s58
      %s62 = sphi 0, %s61
      %s78 = sphi 0, %s62
      %s84 = sphi 0, %s86
      %s87 = sphi 0, %s84
      %s88 = sphi 0, %s87
      %s104 = sphi 0, %s88
      %s108 = sphi 0, %s108
      %s110 = sphi 0, %s108
      %s111 = sphi 0, %s110
      %s125 = sphi 0, %s111
      %s129 = sphi 0, %s129
      %s131 = sphi 0, %s129
      %s132 = sphi 0, %s131
      %s146 = sphi 0, %s132
      %s150 = sphi 0, %s150
      %s152 = sphi 0, %s150
      %s153 = sphi 0, %s152
      %s167 = sphi 0, %s153
      %s171 = sphi 0, %s171
      %s173 = sphi 0, %s171
      %s174 = sphi 0, %s173
      %s188 = sphi 0, %s174
      %s192 = sphi 0, %s192
      %s194 = sphi 0, %s192
      %s195 = sphi 0, %s194
      %s209 = sphi 0, %s195
      %s213 = sphi 0, %s213
      %s215 = sphi 0, %s213
      %s216 = sphi 0, %s215
      %s230 = sphi 0, %s216
      %s236 = sphi 0, %s238
      %s239 = sphi 0, %s236
      %s240 = sphi 0, %s239
      %s256 = sphi 0, %s240
    $region4: #{tpu_custom_call.1} parent=1 // loop_header_branch
      %25 = sbr.rel (%p23) target = $region8
    $region5: #{tpu_custom_call.1} parent=1 // loop_body
      %s27 = ssub.s32 %s22, 1
      %s28 = ssub.s32 %s22, 2
      %s29 = sadd.s32 %s22, 1
      %s30 = ssub.s32 %s22, %s29
      %p31 = scmp.eq.s32.totalorder %s30, 0
      %s33 = sadd.s32 %s32, 1
      %s34 = scalar_select %p31, %s32, %s33
      %p37 = pneg %p31
      %p38 = scmp.eq.s32.totalorder %s22, 1
      %p39 = por %p37, %p38
      %p40 = scmp.ne.s32.totalorder %s32, %s35
      %p41 = scmp.eq.s32.totalorder %s22, 0
      %p42 = por %p40, %p41
      %p43 = scmp.ne.s32.totalorder %s32, %s35
      %p44 = scmp.eq.s32.totalorder %s27, 1
      %p45 = por %p43, %p44
      %p46 = scmp.ne.s32.totalorder %s35, %s36
      %p47 = scmp.eq.s32.totalorder %s27, 0
      %p48 = por %p46, %p47
      %p49 = scmp.ne.s32.totalorder %s35, %s36
      %p50 = scmp.eq.s32.totalorder %s28, 1
      %p51 = por %p49, %p50
      %p53 = scmp.ne.s32.totalorder %s36, %s52
      %p54 = scmp.eq.s32.totalorder %s28, 0
      %p55 = por %p53, %p54
      %s56 = ssub.s32 %s22, %s29
      %p57 = scmp.eq.s32.totalorder %s56, 0
      %s59 = sadd.s32 %s58, 1
      %s60 = scalar_select %p57, %s58, %s59
      %p63 = pneg %p57
      %p64 = scmp.eq.s32.totalorder %s22, 1
      %p65 = por %p63, %p64
      %p66 = scmp.ne.s32.totalorder %s58, %s61
      %p67 = scmp.eq.s32.totalorder %s22, 0
      %p68 = por %p66, %p67
      %p69 = scmp.ne.s32.totalorder %s58, %s61
      %p70 = scmp.eq.s32.totalorder %s27, 1
      %p71 = por %p69, %p70
      %p72 = scmp.ne.s32.totalorder %s61, %s62
      %p73 = scmp.eq.s32.totalorder %s27, 0
      %p74 = por %p72, %p73
      %p75 = scmp.ne.s32.totalorder %s61, %s62
      %p76 = scmp.eq.s32.totalorder %s28, 1
      %p77 = por %p75, %p76
      %p79 = scmp.ne.s32.totalorder %s62, %s78
      %p80 = scmp.eq.s32.totalorder %s28, 0
      %p81 = por %p79, %p80
      %s82 = ssub.s32 %s22, %s29
      %p83 = scmp.eq.s32.totalorder %s82, 0
      %s85 = sadd.s32 %s84, 1
      %s86 = scalar_select %p83, %s84, %s85
      %p89 = pneg %p83
      %p90 = scmp.eq.s32.totalorder %s22, 1
      %p91 = por %p89, %p90
      %p92 = scmp.ne.s32.totalorder %s84, %s87
      %p93 = scmp.eq.s32.totalorder %s22, 0
      %p94 = por %p92, %p93
      %p95 = scmp.ne.s32.totalorder %s84, %s87
      %p96 = scmp.eq.s32.totalorder %s27, 1
      %p97 = por %p95, %p96
      %p98 = scmp.ne.s32.totalorder %s87, %s88
      %p99 = scmp.eq.s32.totalorder %s27, 0
      %p100 = por %p98, %p99
      %p101 = scmp.ne.s32.totalorder %s87, %s88
      %p102 = scmp.eq.s32.totalorder %s28, 1
      %p103 = por %p101, %p102
      %p105 = scmp.ne.s32.totalorder %s88, %s104
      %p106 = scmp.eq.s32.totalorder %s28, 0
      %p107 = por %p105, %p106
      %s109 = sadd.s32 %s108, 1
      %p112 = scmp.eq.s32.totalorder %s22, 1
      %p113 = scmp.ne.s32.totalorder %s108, %s110
      %p114 = scmp.eq.s32.totalorder %s22, 0
      %p115 = por %p113, %p114
      %p116 = scmp.ne.s32.totalorder %s108, %s110
      %p117 = scmp.eq.s32.totalorder %s27, 1
      %p118 = por %p116, %p117
      %p119 = scmp.ne.s32.totalorder %s110, %s111
      %p120 = scmp.eq.s32.totalorder %s27, 0
      %p121 = por %p119, %p120
      %p122 = scmp.ne.s32.totalorder %s110, %s111
      %p123 = scmp.eq.s32.totalorder %s28, 1
      %p124 = por %p122, %p123
      %p126 = scmp.ne.s32.totalorder %s111, %s125
      %p127 = scmp.eq.s32.totalorder %s28, 0
      %p128 = por %p126, %p127
      %s130 = sadd.s32 %s129, 1
      %p133 = scmp.eq.s32.totalorder %s22, 1
      %p134 = scmp.ne.s32.totalorder %s129, %s131
      %p135 = scmp.eq.s32.totalorder %s22, 0
      %p136 = por %p134, %p135
      %p137 = scmp.ne.s32.totalorder %s129, %s131
      %p138 = scmp.eq.s32.totalorder %s27, 1
      %p139 = por %p137, %p138
      %p140 = scmp.ne.s32.totalorder %s131, %s132
      %p141 = scmp.eq.s32.totalorder %s27, 0
      %p142 = por %p140, %p141
      %p143 = scmp.ne.s32.totalorder %s131, %s132
      %p144 = scmp.eq.s32.totalorder %s28, 1
      %p145 = por %p143, %p144
      %p147 = scmp.ne.s32.totalorder %s132, %s146
      %p148 = scmp.eq.s32.totalorder %s28, 0
      %p149 = por %p147, %p148
      %s151 = sadd.s32 %s150, 1
      %p154 = scmp.eq.s32.totalorder %s22, 1
      %p155 = scmp.ne.s32.totalorder %s150, %s152
      %p156 = scmp.eq.s32.totalorder %s22, 0
      %p157 = por %p155, %p156
      %p158 = scmp.ne.s32.totalorder %s150, %s152
      %p159 = scmp.eq.s32.totalorder %s27, 1
      %p160 = por %p158, %p159
      %p161 = scmp.ne.s32.totalorder %s152, %s153
      %p162 = scmp.eq.s32.totalorder %s27, 0
      %p163 = por %p161, %p162
      %p164 = scmp.ne.s32.totalorder %s152, %s153
      %p165 = scmp.eq.s32.totalorder %s28, 1
      %p166 = por %p164, %p165
      %p168 = scmp.ne.s32.totalorder %s153, %s167
      %p169 = scmp.eq.s32.totalorder %s28, 0
      %p170 = por %p168, %p169
      %s172 = sadd.s32 %s171, 1
      %p175 = scmp.eq.s32.totalorder %s22, 1
      %p176 = scmp.ne.s32.totalorder %s171, %s173
      %p177 = scmp.eq.s32.totalorder %s22, 0
      %p178 = por %p176, %p177
      %p179 = scmp.ne.s32.totalorder %s171, %s173
      %p180 = scmp.eq.s32.totalorder %s27, 1
      %p181 = por %p179, %p180
      %p182 = scmp.ne.s32.totalorder %s173, %s174
      %p183 = scmp.eq.s32.totalorder %s27, 0
      %p184 = por %p182, %p183
      %p185 = scmp.ne.s32.totalorder %s173, %s174
      %p186 = scmp.eq.s32.totalorder %s28, 1
      %p187 = por %p185, %p186
      %p189 = scmp.ne.s32.totalorder %s174, %s188
      %p190 = scmp.eq.s32.totalorder %s28, 0
      %p191 = por %p189, %p190
      %s193 = sadd.s32 %s192, 1
      %p196 = scmp.eq.s32.totalorder %s22, 1
      %p197 = scmp.ne.s32.totalorder %s192, %s194
      %p198 = scmp.eq.s32.totalorder %s22, 0
      %p199 = por %p197, %p198
      %p200 = scmp.ne.s32.totalorder %s192, %s194
      %p201 = scmp.eq.s32.totalorder %s27, 1
      %p202 = por %p200, %p201
      %p203 = scmp.ne.s32.totalorder %s194, %s195
      %p204 = scmp.eq.s32.totalorder %s27, 0
      %p205 = por %p203, %p204
      %p206 = scmp.ne.s32.totalorder %s194, %s195
      %p207 = scmp.eq.s32.totalorder %s28, 1
      %p208 = por %p206, %p207
      %p210 = scmp.ne.s32.totalorder %s195, %s209
      %p211 = scmp.eq.s32.totalorder %s28, 0
      %p212 = por %p210, %p211
      %s214 = sadd.s32 %s213, 1
      %p217 = scmp.eq.s32.totalorder %s22, 1
      %p218 = scmp.ne.s32.totalorder %s213, %s215
      %p219 = scmp.eq.s32.totalorder %s22, 0
      %p220 = por %p218, %p219
      %p221 = scmp.ne.s32.totalorder %s213, %s215
      %p222 = scmp.eq.s32.totalorder %s27, 1
      %p223 = por %p221, %p222
      %p224 = scmp.ne.s32.totalorder %s215, %s216
      %p225 = scmp.eq.s32.totalorder %s27, 0
      %p226 = por %p224, %p225
      %p227 = scmp.ne.s32.totalorder %s215, %s216
      %p228 = scmp.eq.s32.totalorder %s28, 1
      %p229 = por %p227, %p228
      %p231 = scmp.ne.s32.totalorder %s216, %s230
      %p232 = scmp.eq.s32.totalorder %s28, 0
      %p233 = por %p231, %p232
      %s234 = ssub.s32 %s22, %s29
      %p235 = scmp.eq.s32.totalorder %s234, 0
      %s237 = sadd.s32 %s236, 1
      %s238 = scalar_select %p235, %s236, %s237
      %p241 = pneg %p235
      %p242 = scmp.eq.s32.totalorder %s22, 1
      %p243 = por %p241, %p242
      %p244 = scmp.ne.s32.totalorder %s236, %s239
      %p245 = scmp.eq.s32.totalorder %s22, 0
      %p246 = por %p244, %p245
      %p247 = scmp.ne.s32.totalorder %s236, %s239
      %p248 = scmp.eq.s32.totalorder %s27, 1
      %p249 = por %p247, %p248
      %p250 = scmp.ne.s32.totalorder %s239, %s240
      %p251 = scmp.eq.s32.totalorder %s27, 0
      %p252 = por %p250, %p251
      %p253 = scmp.ne.s32.totalorder %s239, %s240
      %p254 = scmp.eq.s32.totalorder %s28, 1
      %p255 = por %p253, %p254
      %p257 = scmp.ne.s32.totalorder %s240, %s256
      %p258 = scmp.eq.s32.totalorder %s28, 0
      %p259 = por %p257, %p258
      %p260 = scmp.le.s32.totalorder 1, %s22
      %p261 = scmp.lt.s32.totalorder %s22, 3
      %p262 = pnand %p260, %p261
      %p263 = pneg %p262
      // Predicated region
      $region9: #{tpu_custom_call.1} parent=5 // pred_check
        _
      $region10: #{tpu_custom_call.1} parent=5 // pred_check_branch
        %265 = sbr.rel (%p262) target = $region12
      $region11: #{tpu_custom_call.1} parent=5 // pred_region
        %s266 = ssub.s32 %s22, 1
        // Predicated region
        $region13: #{tpu_custom_call.1} parent=11 // pred_check
          %p267 = pneg %p121
        $region14: #{tpu_custom_call.1} parent=11 // pred_check_branch
          %269 = sbr.rel (%p267) target = $region16
        $region15: #{tpu_custom_call.1} parent=11 // pred_region
          %271 = vsyncadd [#allocation6], 0
          %s272 = sshll.u32 %s3, 4
          %s273 = int_to_ptr.hbm [resolvable:$true] %s272
          %s274 = sshll.u32 [#allocation5], 4
          %s275 = int_to_ptr.vmem [resolvable:$true] %s274
          %280 = dma.hbm_to_vmem [thread:$0]  %s273, 3072, %s275, [#allocation6], 192, 192, 12
        $region16: #{tpu_custom_call.1} parent=11 // pred_fallthru
          _
        // Predicated region
        $region17: #{tpu_custom_call.1} parent=11 // pred_check
          %p281 = pneg %p142
        $region18: #{tpu_custom_call.1} parent=11 // pred_check_branch
          %283 = sbr.rel (%p281) target = $region20
        $region19: #{tpu_custom_call.1} parent=11 // pred_region
          _
        $region20: #{tpu_custom_call.1} parent=11 // pred_fallthru
          _
        // Predicated region
        $region21: #{tpu_custom_call.1} parent=11 // pred_check
          %p284 = pneg %p163
        $region22: #{tpu_custom_call.1} parent=11 // pred_check_branch
          %286 = sbr.rel (%p284) target = $region24
        $region23: #{tpu_custom_call.1} parent=11 // pred_region
          %288 = vsyncadd [#allocation6], 0
          %s289 = sshll.u32 %s5, 4
          %s290 = int_to_ptr.hbm [resolvable:$true] %s289
          %s291 = sshll.u32 [#allocation7], 4
          %s292 = int_to_ptr.vmem [resolvable:$true] %s291
          %297 = dma.hbm_to_vmem [thread:$0]  %s290, 3072, %s292, [#allocation6], 192, 192, 12
        $region24: #{tpu_custom_call.1} parent=11 // pred_fallthru
          _
        // Predicated region
        $region25: #{tpu_custom_call.1} parent=11 // pred_check
          %p298 = pneg %p184
        $region26: #{tpu_custom_call.1} parent=11 // pred_check_branch
          %300 = sbr.rel (%p298) target = $region28
        $region27: #{tpu_custom_call.1} parent=11 // pred_region
          _
        $region28: #{tpu_custom_call.1} parent=11 // pred_fallthru
          _
        // Predicated region
        $region29: #{tpu_custom_call.1} parent=11 // pred_check
          %p301 = pneg %p205
        $region30: #{tpu_custom_call.1} parent=11 // pred_check_branch
          %303 = sbr.rel (%p301) target = $region32
        $region31: #{tpu_custom_call.1} parent=11 // pred_region
          _
        $region32: #{tpu_custom_call.1} parent=11 // pred_fallthru
          _
        // Predicated region
        $region33: #{tpu_custom_call.1} parent=11 // pred_check
          %p304 = pneg %p226
        $region34: #{tpu_custom_call.1} parent=11 // pred_check_branch
          %306 = sbr.rel (%p304) target = $region36
        $region35: #{tpu_custom_call.1} parent=11 // pred_region
          _
        $region36: #{tpu_custom_call.1} parent=11 // pred_fallthru
          _
      $region12: #{tpu_custom_call.1} parent=5 // pred_fallthru
        _
      %p307 = scmp.lt.s32.totalorder %s22, 2
      // Predicated region
      $region37: #{tpu_custom_call.1} parent=5 // pred_check
        %p308 = pneg %p307
      $region38: #{tpu_custom_call.1} parent=5 // pred_check_branch
        %310 = sbr.rel (%p308) target = $region40
      $region39: #{tpu_custom_call.1} parent=5 // pred_region
        // Predicated region
        $region41: #{tpu_custom_call.1} parent=39 // pred_check
          %p311 = pneg %p42
        $region42: #{tpu_custom_call.1} parent=39 // pred_check_branch
          %313 = sbr.rel (%p311) target = $region44
        $region43: #{tpu_custom_call.1} parent=39 // pred_region
          %s314 = sand.u32 %s32, 1
          %s315 = scalar_lea.sflag [#allocation3], %s314
          %s316 = sand.u32 %s32, 1
          %s317 = smul.addr %s316, 16
          %s318 = scalar_lea.vmem [#allocation2], %s317
          %s319 = smul.u32 2, %s22
          %321 = vsyncadd %s315, 0
          %s322 = smul.addr %s319, 8
          %s323 = scalar_lea.hbm %s0, %s322
          %s324 = sshll.u32 %s323, 4
          %s325 = int_to_ptr.hbm [resolvable:$true] %s324
          %s326 = sshll.u32 %s318, 4
          %s327 = int_to_ptr.vmem [resolvable:$true] %s326
          %332 = dma.hbm_to_vmem [thread:$0]  %s325, 256, %s327, %s315, 128, 128, 8
        $region44: #{tpu_custom_call.1} parent=39 // pred_fallthru
          _
        // Predicated region
        $region45: #{tpu_custom_call.1} parent=39 // pred_check
          %p333 = pneg %p68
        $region46: #{tpu_custom_call.1} parent=39 // pred_check_branch
          %335 = sbr.rel (%p333) target = $region48
        $region47: #{tpu_custom_call.1} parent=39 // pred_region
          %s336 = smul.u32 2, %s22
          %p337 = scmp.lt.s32.totalorder %s336, 3
          %s338 = scalar_select %p337, %s336, 3
          %s339 = smul.addr %s338, 8
          %s340 = scalar_lea.vmem %s1, %s339
          %s341 = smul.u32 2, %s22
        $region48: #{tpu_custom_call.1} parent=39 // pred_fallthru
          _
        // Predicated region
        $region49: #{tpu_custom_call.1} parent=39 // pred_check
          %p342 = pneg %p94
        $region50: #{tpu_custom_call.1} parent=39 // pred_check_branch
          %344 = sbr.rel (%p342) target = $region52
        $region51: #{tpu_custom_call.1} parent=39 // pred_region
          %s345 = smul.u32 2, %s22
          %p346 = scmp.lt.s32.totalorder %s345, 3
          %s347 = scalar_select %p346, %s345, 3
          %s348 = smul.addr %s347, 8
          %s349 = scalar_lea.vmem %s2, %s348
          %s350 = smul.u32 2, %s22
        $region52: #{tpu_custom_call.1} parent=39 // pred_fallthru
          _
      $region40: #{tpu_custom_call.1} parent=5 // pred_fallthru
        _
      %p351 = scmp.le.s32.totalorder 1, %s22
      %p352 = scmp.lt.s32.totalorder %s22, 3
      %p353 = pnand %p351, %p352
      %p354 = pneg %p353
      // Predicated region
      $region53: #{tpu_custom_call.1} parent=5 // pred_check
        _
      $region54: #{tpu_custom_call.1} parent=5 // pred_check_branch
        %356 = sbr.rel (%p353) target = $region56
      $region55: #{tpu_custom_call.1} parent=5 // pred_region
        %s357 = ssub.s32 %s22, 1
        %s358 = sand.u32 %s35, 1
        %s359 = scalar_lea.sflag [#allocation3], %s358
        %s360 = sand.u32 %s35, 1
        %s361 = smul.addr %s360, 16
        %s362 = scalar_lea.vmem [#allocation2], %s361
        // Predicated region
        $region57: #{tpu_custom_call.1} parent=55 // pred_check
          %p363 = pneg %p48
        $region58: #{tpu_custom_call.1} parent=55 // pred_check_branch
          %365 = sbr.rel (%p363) target = $region60
        $region59: #{tpu_custom_call.1} parent=55 // pred_region
          %367 = dma.done %s359, 256
        $region60: #{tpu_custom_call.1} parent=55 // pred_fallthru
          _
        // Predicated region
        $region61: #{tpu_custom_call.1} parent=55 // pred_check
          %p368 = pneg %p121
        $region62: #{tpu_custom_call.1} parent=55 // pred_check_branch
          %370 = sbr.rel (%p368) target = $region64
        $region63: #{tpu_custom_call.1} parent=55 // pred_region
          %372 = dma.done [#allocation6], 3072
        $region64: #{tpu_custom_call.1} parent=55 // pred_fallthru
          _
        // Predicated region
        $region65: #{tpu_custom_call.1} parent=55 // pred_check
          %p373 = pneg %p163
        $region66: #{tpu_custom_call.1} parent=55 // pred_check_branch
          %375 = sbr.rel (%p373) target = $region68
        $region67: #{tpu_custom_call.1} parent=55 // pred_region
          %377 = dma.done [#allocation6], 3072
        $region68: #{tpu_custom_call.1} parent=55 // pred_fallthru
          _
        %s378 = sand.u32 %s35, 1
        %s379 = scalar_lea.sflag [#allocation3], %s378
        %s380 = sand.u32 %s35, 1
        %s381 = smul.addr %s380, 16
        %s382 = scalar_lea.vmem [#allocation2], %s381
        %p383 = pneg %p48
        %p384 = pneg %p45
        %s385 = smul.u32 2, %s27
        %p386 = scmp.lt.s32.totalorder %s385, 3
        %s387 = scalar_select %p386, %s385, 3
        %s388 = smul.addr %s387, 8
        %s389 = scalar_lea.vmem %s1, %s388
        %p390 = pneg %p74
        %p391 = pneg %p71
        %s392 = smul.u32 2, %s27
        %p393 = scmp.lt.s32.totalorder %s392, 3
        %s394 = scalar_select %p393, %s392, 3
        %s395 = smul.addr %s394, 8
        %s396 = scalar_lea.vmem %s2, %s395
        %p397 = pneg %p100
        %p398 = pneg %p97
        %p399 = pneg %p121
        %p400 = pneg %p118
        %p401 = pneg %p142
        %p402 = pneg %p139
        %p403 = pneg %p163
        %p404 = pneg %p160
        %p405 = pneg %p184
        %p406 = pneg %p181
        %p407 = pneg %p205
        %p408 = pneg %p202
        %p409 = pneg %p226
        %p410 = pneg %p223
        %p411 = pneg %p252
        %p412 = pneg %p249
        %s413 = sand.u32 %s239, 1
        %s414 = scalar_lea.sflag [#allocation4], %s413
        %s415 = sand.u32 %s239, 1
        %s416 = smul.addr %s415, 16
        %s417 = scalar_lea.vmem [#allocation8], %s416
        %s418 = smul.u32 2, %s27
        %s419 = smul.u32 2, %s27
        %p420 = scmp.lt.s32.totalorder %s419, 3
        %s421 = scalar_select %p420, %s419, 3
        %s422 = smul.addr %s421, 8
        %s423 = scalar_lea.vmem %s1, %s422
        %s424 = smul.u32 2, %s27
        %s425 = smul.u32 2, %s27
        %p426 = scmp.lt.s32.totalorder %s425, 3
        %s427 = scalar_select %p426, %s425, 3
        %s428 = smul.addr %s427, 8
        %s429 = scalar_lea.vmem %s2, %s428
        %s430 = smul.u32 2, %s27
        %s431 = smul.u32 2, %s27
        %v432 = vld [vmem:[%s362] sm:$0xff]
        %v433 = vld [vmem:[%s362 + $0x8] sm:$0xff]
        %v434 = vld [vmem:[%s423] sm:$0xff]
        %v435 = vld [vmem:[%s423 + $0x8] sm:$0xff]
        %vm436 = vcmp.gt.s32.totalorder %v434, 0
        %vm437 = vcmp.gt.s32.totalorder %v435, 0
        %vm438 = vcmp.lt.s32.totalorder %v434, 15
        %vm439 = vcmp.lt.s32.totalorder %v435, 15
        %v440 = vpack.c.bf16 %v433, %v432
        %v441 = vld [vmem:[#allocation5] sm:$0xff]
        %v442 = vld [vmem:[#allocation5 + $0x8] sm:$0xf]
        %v443 = vld [vmem:[#allocation5 + $0xc] sm:$0xff]
        %v444 = vld [vmem:[#allocation5 + $0x14] sm:$0xf]
        %v445 = vld [vmem:[#allocation5 + $0x18] sm:$0xff]
        %v446 = vld [vmem:[#allocation5 + $0x20] sm:$0xf]
        %v447 = vld [vmem:[#allocation5 + $0x24] sm:$0xff]
        %v448 = vld [vmem:[#allocation5 + $0x2c] sm:$0xf]
        %v449 = vld [vmem:[#allocation5 + $0x30] sm:$0xff]
        %v450 = vld [vmem:[#allocation5 + $0x38] sm:$0xf]
        %v451 = vld [vmem:[#allocation5 + $0x3c] sm:$0xff]
        %v452 = vld [vmem:[#allocation5 + $0x44] sm:$0xf]
        %v453 = vld [vmem:[#allocation5 + $0x48] sm:$0xff]
        %v454 = vld [vmem:[#allocation5 + $0x50] sm:$0xf]
        %v455 = vld [vmem:[#allocation5 + $0x54] sm:$0xff]
        %v456 = vld [vmem:[#allocation5 + $0x5c] sm:$0xf]
        %v457 = vld [vmem:[#allocation5 + $0x60] sm:$0xff]
        %v458 = vld [vmem:[#allocation5 + $0x68] sm:$0xf]
        %v459 = vld [vmem:[#allocation5 + $0x6c] sm:$0xff]
        %v460 = vld [vmem:[#allocation5 + $0x74] sm:$0xf]
        %v461 = vld [vmem:[#allocation5 + $0x78] sm:$0xff]
        %v462 = vld [vmem:[#allocation5 + $0x80] sm:$0xf]
        %v463 = vld [vmem:[#allocation5 + $0x84] sm:$0xff]
        %v464 = vld [vmem:[#allocation5 + $0x8c] sm:$0xf]
        %v465 = vld [vmem:[#allocation5 + $0x90] sm:$0xff]
        %v466 = vld [vmem:[#allocation5 + $0x98] sm:$0xf]
        %v467 = vld [vmem:[#allocation5 + $0x9c] sm:$0xff]
        %v468 = vld [vmem:[#allocation5 + $0xa4] sm:$0xf]
        %v469 = vld [vmem:[#allocation5 + $0xa8] sm:$0xff]
        %v470 = vld [vmem:[#allocation5 + $0xb0] sm:$0xf]
        %v471 = vld [vmem:[#allocation5 + $0xb4] sm:$0xff]
        %v472 = vld [vmem:[#allocation5 + $0xbc] sm:$0xf]
        %v505 = vunpack.c.l.b16 %v441
        %v506 = vunpack.c.h.b16 %v441
        %v507 = vunpack.c.l.b16 %v442
        %v508 = vunpack.c.l.b16 %v443
        %v509 = vunpack.c.h.b16 %v443
        %v510 = vunpack.c.l.b16 %v444
        %v511 = vunpack.c.l.b16 %v445
        %v512 = vunpack.c.h.b16 %v445
        %v513 = vunpack.c.l.b16 %v446
        %v514 = vunpack.c.l.b16 %v447
        %v515 = vunpack.c.h.b16 %v447
        %v516 = vunpack.c.l.b16 %v448
        %v517 = vunpack.c.l.b16 %v449
        %v518 = vunpack.c.h.b16 %v449
        %v519 = vunpack.c.l.b16 %v450
        %v520 = vunpack.c.l.b16 %v451
        %v521 = vunpack.c.h.b16 %v451
        %v522 = vunpack.c.l.b16 %v452
        %v523 = vunpack.c.l.b16 %v453
        %v524 = vunpack.c.h.b16 %v453
        %v525 = vunpack.c.l.b16 %v454
        %v526 = vunpack.c.l.b16 %v455
        %v527 = vunpack.c.h.b16 %v455
        %v528 = vunpack.c.l.b16 %v456
        %v529 = vunpack.c.l.b16 %v457
        %v530 = vunpack.c.h.b16 %v457
        %v531 = vunpack.c.l.b16 %v458
        %v532 = vunpack.c.l.b16 %v459
        %v533 = vunpack.c.h.b16 %v459
        %v534 = vunpack.c.l.b16 %v460
        %v535 = vunpack.c.l.b16 %v461
        %v536 = vunpack.c.h.b16 %v461
        %v537 = vunpack.c.l.b16 %v462
        %v538 = vunpack.c.l.b16 %v463
        %v539 = vunpack.c.h.b16 %v463
        %v540 = vunpack.c.l.b16 %v464
        %v541 = vunpack.c.l.b16 %v465
        %v542 = vunpack.c.h.b16 %v465
        %v543 = vunpack.c.l.b16 %v466
        %v544 = vunpack.c.l.b16 %v467
        %v545 = vunpack.c.h.b16 %v467
        %v546 = vunpack.c.l.b16 %v468
        %v547 = vunpack.c.l.b16 %v469
        %v548 = vunpack.c.h.b16 %v469
        %v549 = vunpack.c.l.b16 %v470
        %v550 = vunpack.c.l.b16 %v471
        %v551 = vunpack.c.h.b16 %v471
        %v552 = vunpack.c.l.b16 %v472
        %v553 = vpack.c.b16 %v508, %v505
        %v554 = vpack.c.b16 %v509, %v506
        %v555 = vpack.c.b16 %v510, %v507
        %v556 = vpack.c.b16 %v514, %v511
        %v557 = vpack.c.b16 %v515, %v512
        %v558 = vpack.c.b16 %v516, %v513
        %v559 = vpack.c.b16 %v520, %v517
        %v560 = vpack.c.b16 %v521, %v518
        %v561 = vpack.c.b16 %v522, %v519
        %v562 = vpack.c.b16 %v526, %v523
        %v563 = vpack.c.b16 %v527, %v524
        %v564 = vpack.c.b16 %v528, %v525
        %v565 = vpack.c.b16 %v532, %v529
        %v566 = vpack.c.b16 %v533, %v530
        %v567 = vpack.c.b16 %v534, %v531
        %v568 = vpack.c.b16 %v538, %v535
        %v569 = vpack.c.b16 %v539, %v536
        %v570 = vpack.c.b16 %v540, %v537
        %v571 = vpack.c.b16 %v544, %v541
        %v572 = vpack.c.b16 %v545, %v542
        %v573 = vpack.c.b16 %v546, %v543
        %v574 = vpack.c.b16 %v550, %v547
        %v575 = vpack.c.b16 %v551, %v548
        %v576 = vpack.c.b16 %v552, %v549
        %601 = vmatpush.bf16.msra.mxu0 %v574
        %602 = vmatpush.bf16.msra.mxu0 %v571
        %603 = vmatpush.bf16.msra.mxu0 %v568
        %604 = vmatpush.bf16.msra.mxu0 %v565
        %605 = vmatpush.bf16.msra.mxu0 %v562
        %606 = vmatpush.bf16.msra.mxu0 %v559
        %607 = vmatpush.bf16.msra.mxu0 %v556
        %608 = vmatpush.bf16.msra.mxu0 %v553
        %609 = vmatmul.bf16.gmra.mxu0 %v440
        %v610 = vpop.f32.mrf.mxu0
        %v611 = vadd.f32 0.0, %v610
        %v612 = vpop.f32.mrf.mxu0
        %v613 = vadd.f32 0.0, %v612
        %614 = vdwg.mxu0
        %615 = vmatpush.bf16.msra.mxu0 %v575
        %616 = vmatpush.bf16.msra.mxu0 %v572
        %617 = vmatpush.bf16.msra.mxu0 %v569
        %618 = vmatpush.bf16.msra.mxu0 %v566
        %619 = vmatpush.bf16.msra.mxu0 %v563
        %620 = vmatpush.bf16.msra.mxu0 %v560
        %621 = vmatpush.bf16.msra.mxu0 %v557
        %622 = vmatpush.bf16.msra.mxu0 %v554
        %623 = vmatmul.bf16.gmra.mxu0 %v440
        %v624 = vpop.f32.mrf.mxu0
        %v625 = vadd.f32 0.0, %v624
        %v626 = vpop.f32.mrf.mxu0
        %v627 = vadd.f32 0.0, %v626
        %628 = vdwg.mxu0
        %629 = vmatpush.bf16.msra.mxu0 %v576
        %630 = vmatpush.bf16.msra.mxu0 %v573
        %631 = vmatpush.bf16.msra.mxu0 %v570
        %632 = vmatpush.bf16.msra.mxu0 %v567
        %633 = vmatpush.bf16.msra.mxu0 %v564
        %634 = vmatpush.bf16.msra.mxu0 %v561
        %635 = vmatpush.bf16.msra.mxu0 %v558
        %636 = vmatpush.bf16.msra.mxu0 %v555
        %637 = vmatmul.bf16.gmra.mxu0 %v440
        %v638 = vpop.f32.mrf.mxu0
        %v639 = vadd.f32 0.0, %v638
        %v640 = vpop.f32.mrf.mxu0
        %v641 = vadd.f32 0.0, %v640
        %642 = vdwg.mxu0
        %v643 = vrot.slane %v611, 7
        %v644 = vrot.slane %v613, 7
        %v645 = vlaneseq
        %v646 = vshrl.u32 %v645, 7
        %vm647 = vcmp.lt.s32.totalorder %v646, 1
        %v648 = vsel %vm647, %v643, %v644
        %v649 = vsel %vm647, %v644, %v643
        %v650 = vsel %vm436, 1, 0
        %v651 = vsel %vm437, 1, 0
        %652 = vset.pattern.permute.xlu0 0
        %653 = vperm.xlu0 %652, %v650
        %v654 = vpop.permute.xlu0 %653
        %655 = vset.pattern.permute.xlu0 0
        %656 = vperm.xlu0 %655, %v651
        %v657 = vpop.permute.xlu0 %656
        %vm658 = vcmp.eq.s32.totalorder %v654, 1
        %vm659 = vcmp.eq.s32.totalorder %v657, 1
        %v660 = vsel %vm658, %v649, 0.0
        %v661 = vsel %vm659, %v648, 0.0
        %v662 = vrot.slane %v639, 1
        %v663 = vrot.slane %v641, 1
        %vm664 = vcmp.lt.s32.totalorder %v646, 7
        %v665 = vsel %vm664, %v662, %v663
        %v666 = vsel %vm664, %v663, %v662
        %v667 = vsel %vm438, 1, 0
        %v668 = vsel %vm439, 1, 0
        %669 = vset.pattern.permute.xlu0 0
        %670 = vperm.xlu0 %669, %v667
        %v671 = vpop.permute.xlu0 %670
        %672 = vset.pattern.permute.xlu0 0
        %673 = vperm.xlu0 %672, %v668
        %v674 = vpop.permute.xlu0 %673
        %vm675 = vcmp.eq.s32.totalorder %v671, 1
        %vm676 = vcmp.eq.s32.totalorder %v674, 1
        %v677 = vsel %vm675, %v665, 0.0
        %v678 = vsel %vm676, %v666, 0.0
        %v679 = vadd.f32 %v660, %v625
        %v680 = vadd.f32 %v661, %v627
        %v681 = vadd.f32 %v679, %v677
        %v682 = vadd.f32 %v680, %v678
        %v683 = vld [vmem:[%s4] sm:$0x1]
        %v685 = vperm.slane %v683, 0
        %v687 = vadd.f32 %v681, %v685
        %v688 = vadd.f32 %v682, %v685
        %v689 = vmin.f32 %v687, 20.0
        %v690 = vmin.f32 %v688, 20.0
        %v691 = vmul.f32 %v689, 1.442695
        %v692 = vpow.pop %v691
        %v693 = vmul.f32 %v690, 1.442695
        %v694 = vpow.pop %v693
        %v695 = vadd.f32 %v692, 2.0
        %v696 = vadd.f32 %v694, 2.0
        %v697 = vmul.f32 %v692, %v695
        %v698 = vmul.f32 %v694, %v696
        %v699 = vadd.f32 %v697, 2.0
        %v700 = vadd.f32 %v698, 2.0
        %v701 = vrcp.pop %v699
        %v702 = vmul.f32 %v699, %v701
        %v703 = vsub.f32 1.0, %v702
        %v704 = vmul.f32 %v701, %v703
        %v705 = vadd.f32 %v701, %v704
        %vm706 = vweird.f32 %v699
        %vm707 = vweird.f32 %v701
        %vm708 = vmor %vm706, %vm707
        %v709 = vsel %vm708, %v701, %v705
        %v710 = vand.u32 2147483647, %v699
        %vm711 = vcmp.eq.f32.partialorder %v710, 8.507059e+37
        %v712 = vand.u32 %v699, 2147483648
        %v713 = vor.u32 1.1754944e-38, %v712
        %v714 = vsel %vm711, %v713, %v709
        %v715 = vmul.f32 %v697, %v714
        %v716 = vrcp.pop %v700
        %v717 = vmul.f32 %v700, %v716
        %v718 = vsub.f32 1.0, %v717
        %v719 = vmul.f32 %v716, %v718
        %v720 = vadd.f32 %v716, %v719
        %vm721 = vweird.f32 %v700
        %vm722 = vweird.f32 %v716
        %vm723 = vmor %vm721, %vm722
        %v724 = vsel %vm723, %v716, %v720
        %v725 = vand.u32 2147483647, %v700
        %vm726 = vcmp.eq.f32.partialorder %v725, 8.507059e+37
        %v727 = vand.u32 %v700, 2147483648
        %v728 = vor.u32 1.1754944e-38, %v727
        %v729 = vsel %vm726, %v728, %v724
        %v730 = vmul.f32 %v698, %v729
        %v731 = vmul.f32 %v687, %v715
        %v732 = vmul.f32 %v688, %v730
        %v733 = vpack.c.bf16 %v732, %v731
        %v734 = vld [vmem:[#allocation7] sm:$0xff]
        %v735 = vld [vmem:[#allocation7 + $0x8] sm:$0xf]
        %v736 = vld [vmem:[#allocation7 + $0xc] sm:$0xff]
        %v737 = vld [vmem:[#allocation7 + $0x14] sm:$0xf]
        %v738 = vld [vmem:[#allocation7 + $0x18] sm:$0xff]
        %v739 = vld [vmem:[#allocation7 + $0x20] sm:$0xf]
        %v740 = vld [vmem:[#allocation7 + $0x24] sm:$0xff]
        %v741 = vld [vmem:[#allocation7 + $0x2c] sm:$0xf]
        %v742 = vld [vmem:[#allocation7 + $0x30] sm:$0xff]
        %v743 = vld [vmem:[#allocation7 + $0x38] sm:$0xf]
        %v744 = vld [vmem:[#allocation7 + $0x3c] sm:$0xff]
        %v745 = vld [vmem:[#allocation7 + $0x44] sm:$0xf]
        %v746 = vld [vmem:[#allocation7 + $0x48] sm:$0xff]
        %v747 = vld [vmem:[#allocation7 + $0x50] sm:$0xf]
        %v748 = vld [vmem:[#allocation7 + $0x54] sm:$0xff]
        %v749 = vld [vmem:[#allocation7 + $0x5c] sm:$0xf]
        %v750 = vld [vmem:[#allocation7 + $0x60] sm:$0xff]
        %v751 = vld [vmem:[#allocation7 + $0x68] sm:$0xf]
        %v752 = vld [vmem:[#allocation7 + $0x6c] sm:$0xff]
        %v753 = vld [vmem:[#allocation7 + $0x74] sm:$0xf]
        %v754 = vld [vmem:[#allocation7 + $0x78] sm:$0xff]
        %v755 = vld [vmem:[#allocation7 + $0x80] sm:$0xf]
        %v756 = vld [vmem:[#allocation7 + $0x84] sm:$0xff]
        %v757 = vld [vmem:[#allocation7 + $0x8c] sm:$0xf]
        %v758 = vld [vmem:[#allocation7 + $0x90] sm:$0xff]
        %v759 = vld [vmem:[#allocation7 + $0x98] sm:$0xf]
        %v760 = vld [vmem:[#allocation7 + $0x9c] sm:$0xff]
        %v761 = vld [vmem:[#allocation7 + $0xa4] sm:$0xf]
        %v762 = vld [vmem:[#allocation7 + $0xa8] sm:$0xff]
        %v763 = vld [vmem:[#allocation7 + $0xb0] sm:$0xf]
        %v764 = vld [vmem:[#allocation7 + $0xb4] sm:$0xff]
        %v765 = vld [vmem:[#allocation7 + $0xbc] sm:$0xf]
        %v798 = vunpack.c.l.b16 %v734
        %v799 = vunpack.c.h.b16 %v734
        %v800 = vunpack.c.l.b16 %v735
        %v801 = vunpack.c.l.b16 %v736
        %v802 = vunpack.c.h.b16 %v736
        %v803 = vunpack.c.l.b16 %v737
        %v804 = vunpack.c.l.b16 %v738
        %v805 = vunpack.c.h.b16 %v738
        %v806 = vunpack.c.l.b16 %v739
        %v807 = vunpack.c.l.b16 %v740
        %v808 = vunpack.c.h.b16 %v740
        %v809 = vunpack.c.l.b16 %v741
        %v810 = vunpack.c.l.b16 %v742
        %v811 = vunpack.c.h.b16 %v742
        %v812 = vunpack.c.l.b16 %v743
        %v813 = vunpack.c.l.b16 %v744
        %v814 = vunpack.c.h.b16 %v744
        %v815 = vunpack.c.l.b16 %v745
        %v816 = vunpack.c.l.b16 %v746
        %v817 = vunpack.c.h.b16 %v746
        %v818 = vunpack.c.l.b16 %v747
        %v819 = vunpack.c.l.b16 %v748
        %v820 = vunpack.c.h.b16 %v748
        %v821 = vunpack.c.l.b16 %v749
        %v822 = vunpack.c.l.b16 %v750
        %v823 = vunpack.c.h.b16 %v750
        %v824 = vunpack.c.l.b16 %v751
        %v825 = vunpack.c.l.b16 %v752
        %v826 = vunpack.c.h.b16 %v752
        %v827 = vunpack.c.l.b16 %v753
        %v828 = vunpack.c.l.b16 %v754
        %v829 = vunpack.c.h.b16 %v754
        %v830 = vunpack.c.l.b16 %v755
        %v831 = vunpack.c.l.b16 %v756
        %v832 = vunpack.c.h.b16 %v756
        %v833 = vunpack.c.l.b16 %v757
        %v834 = vunpack.c.l.b16 %v758
        %v835 = vunpack.c.h.b16 %v758
        %v836 = vunpack.c.l.b16 %v759
        %v837 = vunpack.c.l.b16 %v760
        %v838 = vunpack.c.h.b16 %v760
        %v839 = vunpack.c.l.b16 %v761
        %v840 = vunpack.c.l.b16 %v762
        %v841 = vunpack.c.h.b16 %v762
        %v842 = vunpack.c.l.b16 %v763
        %v843 = vunpack.c.l.b16 %v764
        %v844 = vunpack.c.h.b16 %v764
        %v845 = vunpack.c.l.b16 %v765
        %v846 = vpack.c.b16 %v801, %v798
        %v847 = vpack.c.b16 %v802, %v799
        %v848 = vpack.c.b16 %v803, %v800
        %v849 = vpack.c.b16 %v807, %v804
        %v850 = vpack.c.b16 %v808, %v805
        %v851 = vpack.c.b16 %v809, %v806
        %v852 = vpack.c.b16 %v813, %v810
        %v853 = vpack.c.b16 %v814, %v811
        %v854 = vpack.c.b16 %v815, %v812
        %v855 = vpack.c.b16 %v819, %v816
        %v856 = vpack.c.b16 %v820, %v817
        %v857 = vpack.c.b16 %v821, %v818
        %v858 = vpack.c.b16 %v825, %v822
        %v859 = vpack.c.b16 %v826, %v823
        %v860 = vpack.c.b16 %v827, %v824
        %v861 = vpack.c.b16 %v831, %v828
        %v862 = vpack.c.b16 %v832, %v829
        %v863 = vpack.c.b16 %v833, %v830
        %v864 = vpack.c.b16 %v837, %v834
        %v865 = vpack.c.b16 %v838, %v835
        %v866 = vpack.c.b16 %v839, %v836
        %v867 = vpack.c.b16 %v843, %v840
        %v868 = vpack.c.b16 %v844, %v841
        %v869 = vpack.c.b16 %v845, %v842
        %894 = vmatpush.bf16.msra.mxu0 %v867
        %895 = vmatpush.bf16.msra.mxu0 %v864
        %896 = vmatpush.bf16.msra.mxu0 %v861
        %897 = vmatpush.bf16.msra.mxu0 %v858
        %898 = vmatpush.bf16.msra.mxu0 %v855
        %899 = vmatpush.bf16.msra.mxu0 %v852
        %900 = vmatpush.bf16.msra.mxu0 %v849
        %901 = vmatpush.bf16.msra.mxu0 %v846
        %902 = vmatmul.bf16.gmra.mxu0 %v733
        %v903 = vpop.f32.mrf.mxu0
        %v904 = vadd.f32 0.0, %v903
        %v905 = vpop.f32.mrf.mxu0
        %v906 = vadd.f32 0.0, %v905
        %907 = vdwg.mxu0
        %908 = vmatpush.bf16.msra.mxu0 %v868
        %909 = vmatpush.bf16.msra.mxu0 %v865
        %910 = vmatpush.bf16.msra.mxu0 %v862
        %911 = vmatpush.bf16.msra.mxu0 %v859
        %912 = vmatpush.bf16.msra.mxu0 %v856
        %913 = vmatpush.bf16.msra.mxu0 %v853
        %914 = vmatpush.bf16.msra.mxu0 %v850
        %915 = vmatpush.bf16.msra.mxu0 %v847
        %916 = vmatmul.bf16.gmra.mxu0 %v733
        %v917 = vpop.f32.mrf.mxu0
        %v918 = vadd.f32 0.0, %v917
        %v919 = vpop.f32.mrf.mxu0
        %v920 = vadd.f32 0.0, %v919
        %921 = vdwg.mxu0
        %922 = vmatpush.bf16.msra.mxu0 %v869
        %923 = vmatpush.bf16.msra.mxu0 %v866
        %924 = vmatpush.bf16.msra.mxu0 %v863
        %925 = vmatpush.bf16.msra.mxu0 %v860
        %926 = vmatpush.bf16.msra.mxu0 %v857
        %927 = vmatpush.bf16.msra.mxu0 %v854
        %928 = vmatpush.bf16.msra.mxu0 %v851
        %929 = vmatpush.bf16.msra.mxu0 %v848
        %930 = vmatmul.bf16.gmra.mxu0 %v733
        %v931 = vpop.f32.mrf.mxu0
        %v932 = vadd.f32 0.0, %v931
        %v933 = vpop.f32.mrf.mxu0
        %v934 = vadd.f32 0.0, %v933
        %935 = vdwg.mxu0
        %v936 = vrot.slane %v904, 7
        %v937 = vrot.slane %v906, 7
        %v938 = vsel %vm647, %v936, %v937
        %v939 = vsel %vm647, %v937, %v936
        %v940 = vsel %vm658, %v939, 0.0
        %v941 = vsel %vm659, %v938, 0.0
        %v942 = vrot.slane %v932, 1
        %v943 = vrot.slane %v934, 1
        %v944 = vsel %vm664, %v942, %v943
        %v945 = vsel %vm664, %v943, %v942
        %v946 = vsel %vm675, %v944, 0.0
        %v947 = vsel %vm676, %v945, 0.0
        %v948 = vadd.f32 %v940, %v918
        %v949 = vadd.f32 %v941, %v920
        %v950 = vadd.f32 %v948, %v946
        %v951 = vadd.f32 %v949, %v947
        %v952 = vld [vmem:[%s6] sm:$0x1]
        %v954 = vperm.slane %v952, 0
        %v956 = vadd.f32 %v950, %v954
        %v957 = vadd.f32 %v951, %v954
        %v958 = vmin.f32 %v956, 20.0
        %v959 = vmin.f32 %v957, 20.0
        %v960 = vmul.f32 %v958, 1.442695
        %v961 = vpow.pop %v960
        %v962 = vmul.f32 %v959, 1.442695
        %v963 = vpow.pop %v962
        %v964 = vadd.f32 %v961, 2.0
        %v965 = vadd.f32 %v963, 2.0
        %v966 = vmul.f32 %v961, %v964
        %v967 = vmul.f32 %v963, %v965
        %v968 = vadd.f32 %v966, 2.0
        %v969 = vadd.f32 %v967, 2.0
        %v970 = vrcp.pop %v968
        %v971 = vmul.f32 %v968, %v970
        %v972 = vsub.f32 1.0, %v971
        %v973 = vmul.f32 %v970, %v972
        %v974 = vadd.f32 %v970, %v973
        %vm975 = vweird.f32 %v968
        %vm976 = vweird.f32 %v970
        %vm977 = vmor %vm975, %vm976
        %v978 = vsel %vm977, %v970, %v974
        %v979 = vand.u32 2147483647, %v968
        %vm980 = vcmp.eq.f32.partialorder %v979, 8.507059e+37
        %v981 = vand.u32 %v968, 2147483648
        %v982 = vor.u32 1.1754944e-38, %v981
        %v983 = vsel %vm980, %v982, %v978
        %v984 = vmul.f32 %v966, %v983
        %v985 = vrcp.pop %v969
        %v986 = vmul.f32 %v969, %v985
        %v987 = vsub.f32 1.0, %v986
        %v988 = vmul.f32 %v985, %v987
        %v989 = vadd.f32 %v985, %v988
        %vm990 = vweird.f32 %v969
        %vm991 = vweird.f32 %v985
        %vm992 = vmor %vm990, %vm991
        %v993 = vsel %vm992, %v985, %v989
        %v994 = vand.u32 2147483647, %v969
        %vm995 = vcmp.eq.f32.partialorder %v994, 8.507059e+37
        %v996 = vand.u32 %v969, 2147483648
        %v997 = vor.u32 1.1754944e-38, %v996
        %v998 = vsel %vm995, %v997, %v993
        %v999 = vmul.f32 %v967, %v998
        %v1000 = vmul.f32 %v956, %v984
        %v1001 = vmul.f32 %v957, %v999
        %v1002 = vpack.c.bf16 %v1001, %v1000
        %v1003 = vld [vmem:[%s7] sm:$0xf]
        %v1004 = vld [vmem:[%s7 + $0x4] sm:$0xf]
        %v1005 = vld [vmem:[%s7 + $0x8] sm:$0xf]
        %v1006 = vld [vmem:[%s7 + $0xc] sm:$0xf]
        %v1007 = vld [vmem:[%s7 + $0x10] sm:$0xf]
        %v1008 = vld [vmem:[%s7 + $0x14] sm:$0xf]
        %v1009 = vld [vmem:[%s7 + $0x18] sm:$0xf]
        %v1010 = vld [vmem:[%s7 + $0x1c] sm:$0xf]
        %v1011 = vld [vmem:[%s7 + $0x20] sm:$0xf]
        %v1012 = vld [vmem:[%s7 + $0x24] sm:$0xf]
        %v1013 = vld [vmem:[%s7 + $0x28] sm:$0xf]
        %v1014 = vld [vmem:[%s7 + $0x2c] sm:$0xf]
        %v1015 = vld [vmem:[%s7 + $0x30] sm:$0xf]
        %v1016 = vld [vmem:[%s7 + $0x34] sm:$0xf]
        %v1017 = vld [vmem:[%s7 + $0x38] sm:$0xf]
        %v1018 = vld [vmem:[%s7 + $0x3c] sm:$0xf]
        %v1019 = vld [vmem:[%s8] sm:$0x1]
        %v1021 = vperm.slane %v1019, 0
        %v1039 = vunpack.c.l.b16 %v1003
        %v1040 = vunpack.c.l.b16 %v1004
        %v1041 = vunpack.c.l.b16 %v1005
        %v1042 = vunpack.c.l.b16 %v1006
        %v1043 = vunpack.c.l.b16 %v1007
        %v1044 = vunpack.c.l.b16 %v1008
        %v1045 = vunpack.c.l.b16 %v1009
        %v1046 = vunpack.c.l.b16 %v1010
        %v1047 = vunpack.c.l.b16 %v1011
        %v1048 = vunpack.c.l.b16 %v1012
        %v1049 = vunpack.c.l.b16 %v1013
        %v1050 = vunpack.c.l.b16 %v1014
        %v1051 = vunpack.c.l.b16 %v1015
        %v1052 = vunpack.c.l.b16 %v1016
        %v1053 = vunpack.c.l.b16 %v1017
        %v1054 = vunpack.c.l.b16 %v1018
        %v1055 = vpack.c.b16 %v1040, %v1039
        %v1056 = vpack.c.b16 %v1042, %v1041
        %v1057 = vpack.c.b16 %v1044, %v1043
        %v1058 = vpack.c.b16 %v1046, %v1045
        %v1059 = vpack.c.b16 %v1048, %v1047
        %v1060 = vpack.c.b16 %v1050, %v1049
        %v1061 = vpack.c.b16 %v1052, %v1051
        %v1062 = vpack.c.b16 %v1054, %v1053
        %1071 = vmatpush.bf16.msra.mxu0 %v1062
        %1072 = vmatpush.bf16.msra.mxu0 %v1061
        %1073 = vmatpush.bf16.msra.mxu0 %v1060
        %1074 = vmatpush.bf16.msra.mxu0 %v1059
        %1075 = vmatpush.bf16.msra.mxu0 %v1058
        %1076 = vmatpush.bf16.msra.mxu0 %v1057
        %1077 = vmatpush.bf16.msra.mxu0 %v1056
        %1078 = vmatpush.bf16.msra.mxu0 %v1055
        %1079 = vmatmul.bf16.gmra.mxu0 %v1002
        %v1080 = vpop.f32.mrf.mxu0
        %v1081 = vadd.f32 %v1021, %v1080
        %v1082 = vpop.f32.mrf.mxu0
        %v1083 = vadd.f32 %v1021, %v1082
        %1084 = vdwg.mxu0
        %v1085 = vadd.f32 %v1081, %v432
        %v1086 = vadd.f32 %v1083, %v433
        %v1087 = vld [vmem:[%s429] sm:$0xff]
        %v1088 = vld [vmem:[%s429 + $0x8] sm:$0xff]
        %vm1089 = vcmp.lt.s32.totalorder %v434, %v1087
        %vm1090 = vcmp.lt.s32.totalorder %v435, %v1088
        %v1091 = vsel %vm1089, 1, 0
        %v1092 = vsel %vm1090, 1, 0
        %1093 = vset.pattern.permute.xlu0 0
        %1094 = vperm.xlu0 %1093, %v1091
        %v1095 = vpop.permute.xlu0 %1094
        %1096 = vset.pattern.permute.xlu0 0
        %1097 = vperm.xlu0 %1096, %v1092
        %v1098 = vpop.permute.xlu0 %1097
        %vm1099 = vcmp.eq.s32.totalorder %v1095, 1
        %vm1100 = vcmp.eq.s32.totalorder %v1098, 1
        %v1101 = vsel %vm1099, %v1085, 0.0
        %v1102 = vsel %vm1100, %v1086, 0.0
        %1103 = vst [vmem:[%s417] sm:$0xff] %v1101
        %1104 = vst [vmem:[%s417 + $0x8] sm:$0xff] %v1102
        %s1105 = sand.u32 %s239, 1
        %s1106 = scalar_lea.sflag [#allocation4], %s1105
        %s1107 = sand.u32 %s239, 1
        %s1108 = smul.addr %s1107, 16
        %s1109 = scalar_lea.vmem [#allocation8], %s1108
        // Predicated region
        $region69: #{tpu_custom_call.1} parent=55 // pred_check
          %p1110 = pneg %p249
        $region70: #{tpu_custom_call.1} parent=55 // pred_check_branch
          %1112 = sbr.rel (%p1110) target = $region72
        $region71: #{tpu_custom_call.1} parent=55 // pred_region
          %s1113 = smul.u32 2, %s27
          %1115 = vsyncadd %s1106, 0
          %s1116 = smul.addr %s1113, 8
          %s1117 = scalar_lea.hbm %s9, %s1116
          %s1118 = sshll.u32 %s1109, 4
          %s1119 = int_to_ptr.vmem [resolvable:$true] %s1118
          %s1120 = sshll.u32 %s1117, 4
          %s1121 = int_to_ptr.hbm [resolvable:$true] %s1120
          %1126 = dma.vmem_to_hbm [thread:$0]  %s1119, 256, %s1121, %s1106, 128, 128, 8
        $region72: #{tpu_custom_call.1} parent=55 // pred_fallthru
          _
      $region56: #{tpu_custom_call.1} parent=5 // pred_fallthru
        _
      %p1127 = scmp.le.s32.totalorder 2, %s22
      // Predicated region
      $region73: #{tpu_custom_call.1} parent=5 // pred_check
        %p1128 = pneg %p1127
      $region74: #{tpu_custom_call.1} parent=5 // pred_check_branch
        %1130 = sbr.rel (%p1128) target = $region76
      $region75: #{tpu_custom_call.1} parent=5 // pred_region
        %s1131 = ssub.s32 %s22, 2
        // Predicated region
        $region77: #{tpu_custom_call.1} parent=75 // pred_check
          %p1132 = pneg %p255
        $region78: #{tpu_custom_call.1} parent=75 // pred_check_branch
          %1134 = sbr.rel (%p1132) target = $region80
        $region79: #{tpu_custom_call.1} parent=75 // pred_region
          %s1135 = sand.u32 %s240, 1
          %s1136 = scalar_lea.sflag [#allocation4], %s1135
          %s1137 = sand.u32 %s240, 1
          %s1138 = smul.addr %s1137, 16
          %s1139 = scalar_lea.vmem [#allocation8], %s1138
          %1141 = dma.done %s1136, 256
        $region80: #{tpu_custom_call.1} parent=75 // pred_fallthru
          _
      $region76: #{tpu_custom_call.1} parent=5 // pred_fallthru
        _
    $region6: #{tpu_custom_call.1} parent=1 // loop_footer
      %s26 = sadd.s32 1, %s22
    $region7: #{tpu_custom_call.1} parent=1 // loop_footer_branch
      %21 = sbr.rel target = $region3
    $region8: #{tpu_custom_call.1} parent=1 // loop_exit
      _
    %1142 = vsyncpa [#allocation3], 1
    %s1143 = scalar_lea.sflag [#allocation3], 1
    %1144 = vsyncpa %s1143, 1
    %1145 = vsyncpa [#allocation6], 1
    %1146 = vsyncpa [#allocation4], 1
    %s1147 = scalar_lea.sflag [#allocation4], 1
    %1148 = vsyncpa %s1147, 1

</llo_original>
